<compile_context>
chip_gen: v5e
topology: v5e:2x2
jax: 0.10.0
libtpu: 0.0.40
codegen_flags: <defaults>
</compile_context>

<pallas_src>
import jax
import jax.numpy as jnp
from jax.experimental import pallas as pl
from jax.experimental.pallas import tpu as pltpu

DATA_DIM = 35
PAD = 128          # lane-dense width of the fused output slab
BN_EPS = 1e-5

# Row layout of the packed (16, 128) vector slab.
R_B1, R_G1, R_BE1 = 0, 1, 2      # widths 32
R_B2, R_G2, R_BE2 = 3, 4, 5      # widths 16
R_B3, R_G3, R_BE3 = 6, 7, 8      # widths 32
R_B5, R_G5, R_BE5 = 9, 10, 11    # widths 128
R_B6, R_G6, R_BE6 = 12, 13, 14   # widths 64
R_BFIN = 15                      # width 128 (b4 in cols 0:35, b7 at col 35)


def _prelu(h, a):
    # PReLU with a single shared parameter (PyTorch default num_parameters=1).
    return jnp.where(h > 0, h, a * h)


def _bn_train(h, gamma, beta, ones_bt, inv_b):
    # BatchNorm1d training-mode forward.
    # Two-pass (centered) statistics -> no catastrophic cancellation, matches
    # PyTorch's biased batch variance.  Both cross-batch reductions are done on
    # the MXU (ones(1,B) @ .) instead of cross-sublane XLU reductions.
    mu = jnp.dot(ones_bt, h, preferred_element_type=jnp.float32) * inv_b        # (1, F)
    hc = h - mu
    var = jnp.dot(ones_bt, hc * hc, preferred_element_type=jnp.float32) * inv_b  # (1, F)
    return hc * jax.lax.rsqrt(var + BN_EPS) * gamma + beta


def aefuzzy_kernel(
    alphas_ref,   # SMEM (5,)           PReLU alphas
    x_ref,        # VMEM (B, 35)        input (unpadded; MXU pads K internally)
    w1_ref,       # VMEM (35, 32)       enc L1 weight
    w2_ref,       # VMEM (32, 16)       enc L2 weight
    wbr_ref,      # VMEM (16, 256)      [w5 | w3 | 0]  fused branch weight
    w6_ref,       # VMEM (128, 64)      reg L2 weight
    wfin_ref,     # VMEM (96, 128)      rows 0:32 = w4 (cols 0:35), rows 32:96 = w7 (col 35)
    vecs_ref,     # VMEM (16, 128)      packed biases / BN gamma / BN beta / fused final bias
    out_ref,      # VMEM (B, 128)       cols 0:35 = decoded, col 35 = regressor
):
    x = x_ref[...]                                   # (B, 35)
    B = x.shape[0]

    # Hoisted constants shared by all 5 BatchNorms (avoid re-broadcasting).
    ones_bt = jnp.ones((1, B), jnp.float32)
    inv_b = jnp.float32(1.0 / B)

    def bn(h, rg, rbe, width):
        return _bn_train(
            h,
            vecs_ref[rg:rg + 1, 0:width],
            vecs_ref[rbe:rbe + 1, 0:width],
            ones_bt, inv_b,
        )

    # ---------------- encoder ----------------
    h = jnp.dot(x, w1_ref[...], preferred_element_type=jnp.float32)    # (B, 32)
    h = h + vecs_ref[R_B1:R_B1 + 1, 0:32]
    h = _prelu(bn(h, R_G1, R_BE1, 32), alphas_ref[0])
    # Dropout(p=0.0) == identity

    h = jnp.dot(h, w2_ref[...], preferred_element_type=jnp.float32)    # (B, 16)
    h = h + vecs_ref[R_B2:R_B2 + 1, 0:16]
    encoded = _prelu(bn(h, R_G2, R_BE2, 16), alphas_ref[1])            # (B, 16)

    # -------- fused branch matmul: encoded @ [w5 | w3 | 0] --------
    br = jnp.dot(encoded, wbr_ref[...], preferred_element_type=jnp.float32)  # (B, 256)
    r = br[:, 0:128] + vecs_ref[R_B5:R_B5 + 1, :]          # regressor pre-act (B, 128)
    d = br[:, 128:160] + vecs_ref[R_B3:R_B3 + 1, 0:32]     # decoder   pre-act (B, 32)

    # ---------------- decoder branch ----------------
    d = _prelu(bn(d, R_G3, R_BE3, 32), alphas_ref[2])

    # ---------------- regressor branch ----------------
    r = _prelu(bn(r, R_G5, R_BE5, 128), alphas_ref[3])
    r = jnp.dot(r, w6_ref[...], preferred_element_type=jnp.float32)    # (B, 64)
    r = r + vecs_ref[R_B6:R_B6 + 1, 0:64]
    r = _prelu(bn(r, R_G6, R_BE6, 64), alphas_ref[4])

    # -------- fused lane-dense output: dec -> cols 0:35, reg -> col 35 --------
    out = jnp.dot(d, wfin_ref[0:32, :], preferred_element_type=jnp.float32)
    out = out + jnp.dot(r, wfin_ref[32:96, :], preferred_element_type=jnp.float32)
    out_ref[...] = out + vecs_ref[R_BFIN:R_BFIN + 1, :]


# ----------------------------------------------------------------------------
# Host-side packing / wrapper
# ----------------------------------------------------------------------------
def pack_params(p):
    """One-time repacking of the raw params into kernel-friendly slabs."""
    f32 = jnp.float32

    def row(a):
        a = jnp.asarray(a, f32).reshape(1, -1)
        return jnp.pad(a, ((0, 0), (0, PAD - a.shape[1])))

    b_fin = jnp.zeros((1, PAD), f32)
    b_fin = b_fin.at[0, :DATA_DIM].set(p["b4"].reshape(-1))
    b_fin = b_fin.at[0, DATA_DIM].set(p["b7"].reshape(-1)[0])

    vecs = jnp.concatenate(
        [
            row(p["b1"]), row(p["g1"]), row(p["be1"]),
            row(p["b2"]), row(p["g2"]), row(p["be2"]),
            row(p["b3"]), row(p["g3"]), row(p["be3"]),
            row(p["b5"]), row(p["g5"]), row(p["be5"]),
            row(p["b6"]), row(p["g6"]), row(p["be6"]),
            b_fin,
        ],
        axis=0,
    )  # (16, 128)

    wbr = jnp.zeros((16, 256), f32)                                 # [w5 | w3 | 0]
    wbr = wbr.at[:, 0:128].set(p["w5"])
    wbr = wbr.at[:, 128:160].set(p["w3"])

    wfin = jnp.zeros((96, PAD), f32)
    wfin = wfin.at[0:32, 0:DATA_DIM].set(p["w4"])                   # decoder -> cols 0:35
    wfin = wfin.at[32:96, DATA_DIM:DATA_DIM + 1].set(p["w7"])       # regressor -> col 35

    return {
        "alphas": jnp.asarray(p["alphas"], f32),
        "w1": jnp.asarray(p["w1"], f32),     # (35, 32), unpadded
        "w2": jnp.asarray(p["w2"], f32),
        "wbr": wbr,
        "w6": jnp.asarray(p["w6"], f32),
        "wfin": wfin,
        "vecs": vecs,
    }


@jax.jit
def aefuzzy_forward_slab(x, packed):
    """Returns the fused (B, 128) output slab.

    Columns 0:35 hold the decoder output, column 35 the regressor scalar.
    Downstream consumers should read the slab directly; slicing it into two
    separate arrays re-materializes it through HBM and should be done lazily
    where consumed (see unpack_outputs)."""
    B = x.shape[0]

    vmem = pl.BlockSpec(memory_space=pltpu.MemorySpace.VMEM)
    smem = pl.BlockSpec(memory_space=pltpu.MemorySpace.SMEM)

    # Advisory cost estimate for XLA's scheduler around the custom call.
    matmul_flops = 2 * B * (DATA_DIM * 32 + 32 * 16 + 16 * 256 + 128 * 64 + 96 * 128)
    bn_flops = 4 * B * (32 + 16 + 32 + 128 + 64)   # 2 MXU reductions per BN layer
    weight_bytes = 4 * (DATA_DIM * 32 + 32 * 16 + 16 * 256 + 128 * 64 + 96 * 128 + 16 * 128 + 5)
    bytes_accessed = weight_bytes + 4 * B * DATA_DIM + 4 * B * PAD
    cost = pl.CostEstimate(
        flops=int(matmul_flops + bn_flops),
        transcendentals=32 + 16 + 32 + 128 + 64,          # 5 rsqrt vectors
        bytes_accessed=int(bytes_accessed),
    )

    # Explicit scoped-VMEM budget, capped at v7x's 64 MiB physical VMEM so a
    # large ungridded batch fails loudly instead of spilling silently.
    vmem_limit = int(min(64 << 20, max(16 << 20, (2 << 20) + B * 8 * 1024)))

    return pl.pallas_call(
        aefuzzy_kernel,
        out_shape=jax.ShapeDtypeStruct((B, PAD), jnp.float32),
        in_specs=[smem, vmem, vmem, vmem, vmem, vmem, vmem, vmem],
        out_specs=vmem,
        compiler_params=pltpu.CompilerParams(vmem_limit_bytes=vmem_limit),
        cost_estimate=cost,
    )(
        packed["alphas"], x,
        packed["w1"], packed["w2"], packed["wbr"],
        packed["w6"], packed["wfin"], packed["vecs"],
    )


def unpack_outputs(slab):
    """Validation / convenience split of the fused slab (do this lazily, at the
    consumer, not inside the forward path)."""
    return slab[:, :DATA_DIM], slab[:, DATA_DIM:DATA_DIM + 1]


# ----------------------------------------------------------------------------
# Init + pure-JAX reference + self-test
# ----------------------------------------------------------------------------
def init_params(key):
    """Deterministic init mirroring PyTorch defaults (U(-1/sqrt(fan_in), .)),
    BN gamma≈1 / beta≈0 (slightly perturbed), PReLU alpha=0.25."""
    dims = [
        ("w1", "b1", DATA_DIM, 32),
        ("w2", "b2", 32, 16),
        ("w3", "b3", 16, 32),
        ("w4", "b4", 32, DATA_DIM),
        ("w5", "b5", 16, 128),
        ("w6", "b6", 128, 64),
        ("w7", "b7", 64, 1),
    ]
    params = {}
    for wname, bname, fin, fout in dims:
        key, kw, kb = jax.random.split(key, 3)
        bound = 1.0 / jnp.sqrt(float(fin))
        # stored as [in, out] (transpose of torch's [out, in]); kernel does x @ W
        params[wname] = jax.random.uniform(
            kw, (fin, fout), jnp.float32, minval=-bound, maxval=bound
        )
        params[bname] = jax.random.uniform(
            kb, (1, fout), jnp.float32, minval=-bound, maxval=bound
        )
    for gname, bename, n in [
        ("g1", "be1", 32), ("g2", "be2", 16), ("g3", "be3", 32),
        ("g5", "be5", 128), ("g6", "be6", 64),
    ]:
        key, kg, kbe = jax.random.split(key, 3)
        params[gname] = 1.0 + 0.1 * jax.random.normal(kg, (1, n), jnp.float32)
        params[bename] = 0.1 * jax.random.normal(kbe, (1, n), jnp.float32)
    params["alphas"] = jnp.full((5,), 0.25, jnp.float32)
    return params


def aefuzzy_reference(x, p):
    """Pure-JAX reference (two-pass BN, unfused) for validation."""
    def bn(h, g, b):
        mu = jnp.mean(h, axis=0, keepdims=True)
        var = jnp.mean((h - mu) ** 2, axis=0, keepdims=True)
        return (h - mu) / jnp.sqrt(var + BN_EPS) * g + b

    def prelu(h, a):
        return jnp.where(h > 0, h, a * h)

    h = prelu(bn(x @ p["w1"] + p["b1"], p["g1"], p["be1"]), p["alphas"][0])
    enc = prelu(bn(h @ p["w2"] + p["b2"], p["g2"], p["be2"]), p["alphas"][1])
    d = prelu(bn(enc @ p["w3"] + p["b3"], p["g3"], p["be3"]), p["alphas"][2])
    dec = d @ p["w4"] + p["b4"]
    r = prelu(bn(enc @ p["w5"] + p["b5"], p["g5"], p["be5"]), p["alphas"][3])
    r = prelu(bn(r @ p["w6"] + p["b6"], p["g6"], p["be6"]), p["alphas"][4])
    reg = r @ p["w7"] + p["b7"]
    return dec, reg


if __name__ == "__main__":
    key = jax.random.PRNGKey(0)
    key, kx, kp = jax.random.split(key, 3)

    B = 8
    x = jax.random.normal(kx, (B, DATA_DIM), jnp.float32)
    params = init_params(kp)
    packed = pack_params(params)

    slab = aefuzzy_forward_slab(x, packed)
    jax.block_until_ready(slab)
    assert slab.shape == (B, PAD)

    # Validation-only split (outside the jitted forward path).
    decoded, reg_out = unpack_outputs(slab)
    assert decoded.shape == (B, DATA_DIM) and reg_out.shape == (B, 1)

    dec_ref, reg_ref = aefuzzy_reference(x, params)
    assert jnp.allclose(decoded, dec_ref, rtol=1e-4, atol=1e-4)
    assert jnp.allclose(reg_out, reg_ref, rtol=1e-4, atol=1e-4)

    print("KERNEL_OK")
</pallas_src>

<mosaic_0001>
module attributes {stable_mosaic.version = 11 : i64} {
  func.func @aefuzzy_kernel(%arg0: memref<5xf32, #tpu.memory_space<smem>>, %arg1: memref<8x35xf32, #tpu.memory_space<vmem>>, %arg2: memref<35x32xf32, #tpu.memory_space<vmem>>, %arg3: memref<32x16xf32, #tpu.memory_space<vmem>>, %arg4: memref<16x256xf32, #tpu.memory_space<vmem>>, %arg5: memref<128x64xf32, #tpu.memory_space<vmem>>, %arg6: memref<96x128xf32, #tpu.memory_space<vmem>>, %arg7: memref<16x128xf32, #tpu.memory_space<vmem>>, %arg8: memref<8x128xf32, #tpu.memory_space<vmem>>) attributes {dimension_semantics = [], scalar_prefetch = 0 : i64, scratch_operands = 0 : i64, tpu.core_type = #tpu.core_type<tc>} {
    %c0 = arith.constant 0 : index
    %c0_0 = arith.constant 0 : index
    %0 = vector.load %arg1[%c0, %c0_0] : memref<8x35xf32, #tpu.memory_space<vmem>>, vector<8x35xf32>
    %cst = arith.constant 1.000000e+00 : f32
    %1 = vector.broadcast %cst : f32 to vector<1x8xf32>
    %c0_1 = arith.constant 0 : index
    %c0_2 = arith.constant 0 : index
    %2 = vector.load %arg2[%c0_1, %c0_2] : memref<35x32xf32, #tpu.memory_space<vmem>>, vector<35x32xf32>
    %cst_3 = arith.constant dense<0.000000e+00> : vector<8x32xf32>
    %3 = tpu.matmul %0, %2, %cst_3 {dimension_numbers = #tpu.dot_dimension_numbers<[1], [0], [0], [1], [0, 0, 1, 1], [], []>} : vector<8x35xf32>, vector<35x32xf32>, vector<8x32xf32> -> vector<8x32xf32>
    %c0_4 = arith.constant 0 : index
    %c0_5 = arith.constant 0 : index
    %4 = vector.load %arg7[%c0_4, %c0_5] : memref<16x128xf32, #tpu.memory_space<vmem>>, vector<1x32xf32>
    %5 = vector.broadcast %4 : vector<1x32xf32> to vector<8x32xf32>
    %6 = arith.addf %3, %5 : vector<8x32xf32>
    %c1 = arith.constant 1 : index
    %c0_6 = arith.constant 0 : index
    %7 = vector.load %arg7[%c1, %c0_6] : memref<16x128xf32, #tpu.memory_space<vmem>>, vector<1x32xf32>
    %c2 = arith.constant 2 : index
    %c0_7 = arith.constant 0 : index
    %8 = vector.load %arg7[%c2, %c0_7] : memref<16x128xf32, #tpu.memory_space<vmem>>, vector<1x32xf32>
    %cst_8 = arith.constant dense<0.000000e+00> : vector<1x32xf32>
    %9 = tpu.matmul %1, %6, %cst_8 {dimension_numbers = #tpu.dot_dimension_numbers<[1], [0], [0], [1], [0, 0, 1, 1], [], []>} : vector<1x8xf32>, vector<8x32xf32>, vector<1x32xf32> -> vector<1x32xf32>
    %cst_9 = arith.constant 1.250000e-01 : f32
    %10 = vector.broadcast %cst_9 : f32 to vector<1x32xf32>
    %11 = arith.mulf %9, %10 : vector<1x32xf32>
    %12 = vector.broadcast %11 : vector<1x32xf32> to vector<8x32xf32>
    %13 = arith.subf %6, %12 : vector<8x32xf32>
    %14 = arith.mulf %13, %13 : vector<8x32xf32>
    %cst_10 = arith.constant dense<0.000000e+00> : vector<1x32xf32>
    %15 = tpu.matmul %1, %14, %cst_10 {dimension_numbers = #tpu.dot_dimension_numbers<[1], [0], [0], [1], [0, 0, 1, 1], [], []>} : vector<1x8xf32>, vector<8x32xf32>, vector<1x32xf32> -> vector<1x32xf32>
    %cst_11 = arith.constant 1.250000e-01 : f32
    %16 = vector.broadcast %cst_11 : f32 to vector<1x32xf32>
    %17 = arith.mulf %15, %16 : vector<1x32xf32>
    %cst_12 = arith.constant 9.99999974E-6 : f32
    %18 = vector.broadcast %cst_12 : f32 to vector<1x32xf32>
    %19 = arith.addf %17, %18 : vector<1x32xf32>
    %20 = math.rsqrt %19 : vector<1x32xf32>
    %21 = vector.broadcast %20 : vector<1x32xf32> to vector<8x32xf32>
    %22 = arith.mulf %13, %21 : vector<8x32xf32>
    %23 = vector.broadcast %7 : vector<1x32xf32> to vector<8x32xf32>
    %24 = arith.mulf %22, %23 : vector<8x32xf32>
    %25 = vector.broadcast %8 : vector<1x32xf32> to vector<8x32xf32>
    %26 = arith.addf %24, %25 : vector<8x32xf32>
    %c0_13 = arith.constant 0 : index
    %27 = memref.load %arg0[%c0_13] : memref<5xf32, #tpu.memory_space<smem>>
    %cst_14 = arith.constant 0.000000e+00 : f32
    %28 = vector.broadcast %cst_14 : f32 to vector<8x32xf32>
    %29 = arith.cmpf ogt, %26, %28 : vector<8x32xf32>
    %30 = vector.broadcast %27 : f32 to vector<8x32xf32>
    %31 = arith.mulf %30, %26 : vector<8x32xf32>
    %32 = arith.select %29, %26, %31 : vector<8x32xi1>, vector<8x32xf32>
    %c0_15 = arith.constant 0 : index
    %c0_16 = arith.constant 0 : index
    %33 = vector.load %arg3[%c0_15, %c0_16] : memref<32x16xf32, #tpu.memory_space<vmem>>, vector<32x16xf32>
    %cst_17 = arith.constant dense<0.000000e+00> : vector<8x16xf32>
    %34 = tpu.matmul %32, %33, %cst_17 {dimension_numbers = #tpu.dot_dimension_numbers<[1], [0], [0], [1], [0, 0, 1, 1], [], []>} : vector<8x32xf32>, vector<32x16xf32>, vector<8x16xf32> -> vector<8x16xf32>
    %c3 = arith.constant 3 : index
    %c0_18 = arith.constant 0 : index
    %35 = vector.load %arg7[%c3, %c0_18] : memref<16x128xf32, #tpu.memory_space<vmem>>, vector<1x16xf32>
    %36 = vector.broadcast %35 : vector<1x16xf32> to vector<8x16xf32>
    %37 = arith.addf %34, %36 : vector<8x16xf32>
    %c4 = arith.constant 4 : index
    %c0_19 = arith.constant 0 : index
    %38 = vector.load %arg7[%c4, %c0_19] : memref<16x128xf32, #tpu.memory_space<vmem>>, vector<1x16xf32>
    %c5 = arith.constant 5 : index
    %c0_20 = arith.constant 0 : index
    %39 = vector.load %arg7[%c5, %c0_20] : memref<16x128xf32, #tpu.memory_space<vmem>>, vector<1x16xf32>
    %cst_21 = arith.constant dense<0.000000e+00> : vector<1x16xf32>
    %40 = tpu.matmul %1, %37, %cst_21 {dimension_numbers = #tpu.dot_dimension_numbers<[1], [0], [0], [1], [0, 0, 1, 1], [], []>} : vector<1x8xf32>, vector<8x16xf32>, vector<1x16xf32> -> vector<1x16xf32>
    %cst_22 = arith.constant 1.250000e-01 : f32
    %41 = vector.broadcast %cst_22 : f32 to vector<1x16xf32>
    %42 = arith.mulf %40, %41 : vector<1x16xf32>
    %43 = vector.broadcast %42 : vector<1x16xf32> to vector<8x16xf32>
    %44 = arith.subf %37, %43 : vector<8x16xf32>
    %45 = arith.mulf %44, %44 : vector<8x16xf32>
    %cst_23 = arith.constant dense<0.000000e+00> : vector<1x16xf32>
    %46 = tpu.matmul %1, %45, %cst_23 {dimension_numbers = #tpu.dot_dimension_numbers<[1], [0], [0], [1], [0, 0, 1, 1], [], []>} : vector<1x8xf32>, vector<8x16xf32>, vector<1x16xf32> -> vector<1x16xf32>
    %cst_24 = arith.constant 1.250000e-01 : f32
    %47 = vector.broadcast %cst_24 : f32 to vector<1x16xf32>
    %48 = arith.mulf %46, %47 : vector<1x16xf32>
    %cst_25 = arith.constant 9.99999974E-6 : f32
    %49 = vector.broadcast %cst_25 : f32 to vector<1x16xf32>
    %50 = arith.addf %48, %49 : vector<1x16xf32>
    %51 = math.rsqrt %50 : vector<1x16xf32>
    %52 = vector.broadcast %51 : vector<1x16xf32> to vector<8x16xf32>
    %53 = arith.mulf %44, %52 : vector<8x16xf32>
    %54 = vector.broadcast %38 : vector<1x16xf32> to vector<8x16xf32>
    %55 = arith.mulf %53, %54 : vector<8x16xf32>
    %56 = vector.broadcast %39 : vector<1x16xf32> to vector<8x16xf32>
    %57 = arith.addf %55, %56 : vector<8x16xf32>
    %c1_26 = arith.constant 1 : index
    %58 = memref.load %arg0[%c1_26] : memref<5xf32, #tpu.memory_space<smem>>
    %cst_27 = arith.constant 0.000000e+00 : f32
    %59 = vector.broadcast %cst_27 : f32 to vector<8x16xf32>
    %60 = arith.cmpf ogt, %57, %59 : vector<8x16xf32>
    %61 = vector.broadcast %58 : f32 to vector<8x16xf32>
    %62 = arith.mulf %61, %57 : vector<8x16xf32>
    %63 = arith.select %60, %57, %62 : vector<8x16xi1>, vector<8x16xf32>
    %c0_28 = arith.constant 0 : index
    %c0_29 = arith.constant 0 : index
    %64 = vector.load %arg4[%c0_28, %c0_29] : memref<16x256xf32, #tpu.memory_space<vmem>>, vector<16x256xf32>
    %cst_30 = arith.constant dense<0.000000e+00> : vector<8x256xf32>
    %65 = tpu.matmul %63, %64, %cst_30 {dimension_numbers = #tpu.dot_dimension_numbers<[1], [0], [0], [1], [0, 0, 1, 1], [], []>} : vector<8x16xf32>, vector<16x256xf32>, vector<8x256xf32> -> vector<8x256xf32>
    %66 = vector.extract_strided_slice %65 {offsets = [0, 0], sizes = [8, 128], strides = [1, 1]} : vector<8x256xf32> to vector<8x128xf32>
    %c9 = arith.constant 9 : index
    %c0_31 = arith.constant 0 : index
    %67 = vector.load %arg7[%c9, %c0_31] : memref<16x128xf32, #tpu.memory_space<vmem>>, vector<1x128xf32>
    %68 = vector.broadcast %67 : vector<1x128xf32> to vector<8x128xf32>
    %69 = arith.addf %66, %68 : vector<8x128xf32>
    %70 = vector.extract_strided_slice %65 {offsets = [0, 128], sizes = [8, 32], strides = [1, 1]} : vector<8x256xf32> to vector<8x32xf32>
    %c6 = arith.constant 6 : index
    %c0_32 = arith.constant 0 : index
    %71 = vector.load %arg7[%c6, %c0_32] : memref<16x128xf32, #tpu.memory_space<vmem>>, vector<1x32xf32>
    %72 = vector.broadcast %71 : vector<1x32xf32> to vector<8x32xf32>
    %73 = arith.addf %70, %72 : vector<8x32xf32>
    %c7 = arith.constant 7 : index
    %c0_33 = arith.constant 0 : index
    %74 = vector.load %arg7[%c7, %c0_33] : memref<16x128xf32, #tpu.memory_space<vmem>>, vector<1x32xf32>
    %c8 = arith.constant 8 : index
    %c0_34 = arith.constant 0 : index
    %75 = vector.load %arg7[%c8, %c0_34] : memref<16x128xf32, #tpu.memory_space<vmem>>, vector<1x32xf32>
    %cst_35 = arith.constant dense<0.000000e+00> : vector<1x32xf32>
    %76 = tpu.matmul %1, %73, %cst_35 {dimension_numbers = #tpu.dot_dimension_numbers<[1], [0], [0], [1], [0, 0, 1, 1], [], []>} : vector<1x8xf32>, vector<8x32xf32>, vector<1x32xf32> -> vector<1x32xf32>
    %cst_36 = arith.constant 1.250000e-01 : f32
    %77 = vector.broadcast %cst_36 : f32 to vector<1x32xf32>
    %78 = arith.mulf %76, %77 : vector<1x32xf32>
    %79 = vector.broadcast %78 : vector<1x32xf32> to vector<8x32xf32>
    %80 = arith.subf %73, %79 : vector<8x32xf32>
    %81 = arith.mulf %80, %80 : vector<8x32xf32>
    %cst_37 = arith.constant dense<0.000000e+00> : vector<1x32xf32>
    %82 = tpu.matmul %1, %81, %cst_37 {dimension_numbers = #tpu.dot_dimension_numbers<[1], [0], [0], [1], [0, 0, 1, 1], [], []>} : vector<1x8xf32>, vector<8x32xf32>, vector<1x32xf32> -> vector<1x32xf32>
    %cst_38 = arith.constant 1.250000e-01 : f32
    %83 = vector.broadcast %cst_38 : f32 to vector<1x32xf32>
    %84 = arith.mulf %82, %83 : vector<1x32xf32>
    %cst_39 = arith.constant 9.99999974E-6 : f32
    %85 = vector.broadcast %cst_39 : f32 to vector<1x32xf32>
    %86 = arith.addf %84, %85 : vector<1x32xf32>
    %87 = math.rsqrt %86 : vector<1x32xf32>
    %88 = vector.broadcast %87 : vector<1x32xf32> to vector<8x32xf32>
    %89 = arith.mulf %80, %88 : vector<8x32xf32>
    %90 = vector.broadcast %74 : vector<1x32xf32> to vector<8x32xf32>
    %91 = arith.mulf %89, %90 : vector<8x32xf32>
    %92 = vector.broadcast %75 : vector<1x32xf32> to vector<8x32xf32>
    %93 = arith.addf %91, %92 : vector<8x32xf32>
    %c2_40 = arith.constant 2 : index
    %94 = memref.load %arg0[%c2_40] : memref<5xf32, #tpu.memory_space<smem>>
    %cst_41 = arith.constant 0.000000e+00 : f32
    %95 = vector.broadcast %cst_41 : f32 to vector<8x32xf32>
    %96 = arith.cmpf ogt, %93, %95 : vector<8x32xf32>
    %97 = vector.broadcast %94 : f32 to vector<8x32xf32>
    %98 = arith.mulf %97, %93 : vector<8x32xf32>
    %99 = arith.select %96, %93, %98 : vector<8x32xi1>, vector<8x32xf32>
    %c10 = arith.constant 10 : index
    %c0_42 = arith.constant 0 : index
    %100 = vector.load %arg7[%c10, %c0_42] : memref<16x128xf32, #tpu.memory_space<vmem>>, vector<1x128xf32>
    %c11 = arith.constant 11 : index
    %c0_43 = arith.constant 0 : index
    %101 = vector.load %arg7[%c11, %c0_43] : memref<16x128xf32, #tpu.memory_space<vmem>>, vector<1x128xf32>
    %cst_44 = arith.constant dense<0.000000e+00> : vector<1x128xf32>
    %102 = tpu.matmul %1, %69, %cst_44 {dimension_numbers = #tpu.dot_dimension_numbers<[1], [0], [0], [1], [0, 0, 1, 1], [], []>} : vector<1x8xf32>, vector<8x128xf32>, vector<1x128xf32> -> vector<1x128xf32>
    %cst_45 = arith.constant 1.250000e-01 : f32
    %103 = vector.broadcast %cst_45 : f32 to vector<1x128xf32>
    %104 = arith.mulf %102, %103 : vector<1x128xf32>
    %105 = vector.broadcast %104 : vector<1x128xf32> to vector<8x128xf32>
    %106 = arith.subf %69, %105 : vector<8x128xf32>
    %107 = arith.mulf %106, %106 : vector<8x128xf32>
    %cst_46 = arith.constant dense<0.000000e+00> : vector<1x128xf32>
    %108 = tpu.matmul %1, %107, %cst_46 {dimension_numbers = #tpu.dot_dimension_numbers<[1], [0], [0], [1], [0, 0, 1, 1], [], []>} : vector<1x8xf32>, vector<8x128xf32>, vector<1x128xf32> -> vector<1x128xf32>
    %cst_47 = arith.constant 1.250000e-01 : f32
    %109 = vector.broadcast %cst_47 : f32 to vector<1x128xf32>
    %110 = arith.mulf %108, %109 : vector<1x128xf32>
    %cst_48 = arith.constant 9.99999974E-6 : f32
    %111 = vector.broadcast %cst_48 : f32 to vector<1x128xf32>
    %112 = arith.addf %110, %111 : vector<1x128xf32>
    %113 = math.rsqrt %112 : vector<1x128xf32>
    %114 = vector.broadcast %113 : vector<1x128xf32> to vector<8x128xf32>
    %115 = arith.mulf %106, %114 : vector<8x128xf32>
    %116 = vector.broadcast %100 : vector<1x128xf32> to vector<8x128xf32>
    %117 = arith.mulf %115, %116 : vector<8x128xf32>
    %118 = vector.broadcast %101 : vector<1x128xf32> to vector<8x128xf32>
    %119 = arith.addf %117, %118 : vector<8x128xf32>
    %c3_49 = arith.constant 3 : index
    %120 = memref.load %arg0[%c3_49] : memref<5xf32, #tpu.memory_space<smem>>
    %cst_50 = arith.constant 0.000000e+00 : f32
    %121 = vector.broadcast %cst_50 : f32 to vector<8x128xf32>
    %122 = arith.cmpf ogt, %119, %121 : vector<8x128xf32>
    %123 = vector.broadcast %120 : f32 to vector<8x128xf32>
    %124 = arith.mulf %123, %119 : vector<8x128xf32>
    %125 = arith.select %122, %119, %124 : vector<8x128xi1>, vector<8x128xf32>
    %c0_51 = arith.constant 0 : index
    %c0_52 = arith.constant 0 : index
    %126 = vector.load %arg5[%c0_51, %c0_52] : memref<128x64xf32, #tpu.memory_space<vmem>>, vector<128x64xf32>
    %cst_53 = arith.constant dense<0.000000e+00> : vector<8x64xf32>
    %127 = tpu.matmul %125, %126, %cst_53 {dimension_numbers = #tpu.dot_dimension_numbers<[1], [0], [0], [1], [0, 0, 1, 1], [], []>} : vector<8x128xf32>, vector<128x64xf32>, vector<8x64xf32> -> vector<8x64xf32>
    %c12 = arith.constant 12 : index
    %c0_54 = arith.constant 0 : index
    %128 = vector.load %arg7[%c12, %c0_54] : memref<16x128xf32, #tpu.memory_space<vmem>>, vector<1x64xf32>
    %129 = vector.broadcast %128 : vector<1x64xf32> to vector<8x64xf32>
    %130 = arith.addf %127, %129 : vector<8x64xf32>
    %c13 = arith.constant 13 : index
    %c0_55 = arith.constant 0 : index
    %131 = vector.load %arg7[%c13, %c0_55] : memref<16x128xf32, #tpu.memory_space<vmem>>, vector<1x64xf32>
    %c14 = arith.constant 14 : index
    %c0_56 = arith.constant 0 : index
    %132 = vector.load %arg7[%c14, %c0_56] : memref<16x128xf32, #tpu.memory_space<vmem>>, vector<1x64xf32>
    %cst_57 = arith.constant dense<0.000000e+00> : vector<1x64xf32>
    %133 = tpu.matmul %1, %130, %cst_57 {dimension_numbers = #tpu.dot_dimension_numbers<[1], [0], [0], [1], [0, 0, 1, 1], [], []>} : vector<1x8xf32>, vector<8x64xf32>, vector<1x64xf32> -> vector<1x64xf32>
    %cst_58 = arith.constant 1.250000e-01 : f32
    %134 = vector.broadcast %cst_58 : f32 to vector<1x64xf32>
    %135 = arith.mulf %133, %134 : vector<1x64xf32>
    %136 = vector.broadcast %135 : vector<1x64xf32> to vector<8x64xf32>
    %137 = arith.subf %130, %136 : vector<8x64xf32>
    %138 = arith.mulf %137, %137 : vector<8x64xf32>
    %cst_59 = arith.constant dense<0.000000e+00> : vector<1x64xf32>
    %139 = tpu.matmul %1, %138, %cst_59 {dimension_numbers = #tpu.dot_dimension_numbers<[1], [0], [0], [1], [0, 0, 1, 1], [], []>} : vector<1x8xf32>, vector<8x64xf32>, vector<1x64xf32> -> vector<1x64xf32>
    %cst_60 = arith.constant 1.250000e-01 : f32
    %140 = vector.broadcast %cst_60 : f32 to vector<1x64xf32>
    %141 = arith.mulf %139, %140 : vector<1x64xf32>
    %cst_61 = arith.constant 9.99999974E-6 : f32
    %142 = vector.broadcast %cst_61 : f32 to vector<1x64xf32>
    %143 = arith.addf %141, %142 : vector<1x64xf32>
    %144 = math.rsqrt %143 : vector<1x64xf32>
    %145 = vector.broadcast %144 : vector<1x64xf32> to vector<8x64xf32>
    %146 = arith.mulf %137, %145 : vector<8x64xf32>
    %147 = vector.broadcast %131 : vector<1x64xf32> to vector<8x64xf32>
    %148 = arith.mulf %146, %147 : vector<8x64xf32>
    %149 = vector.broadcast %132 : vector<1x64xf32> to vector<8x64xf32>
    %150 = arith.addf %148, %149 : vector<8x64xf32>
    %c4_62 = arith.constant 4 : index
    %151 = memref.load %arg0[%c4_62] : memref<5xf32, #tpu.memory_space<smem>>
    %cst_63 = arith.constant 0.000000e+00 : f32
    %152 = vector.broadcast %cst_63 : f32 to vector<8x64xf32>
    %153 = arith.cmpf ogt, %150, %152 : vector<8x64xf32>
    %154 = vector.broadcast %151 : f32 to vector<8x64xf32>
    %155 = arith.mulf %154, %150 : vector<8x64xf32>
    %156 = arith.select %153, %150, %155 : vector<8x64xi1>, vector<8x64xf32>
    %c0_64 = arith.constant 0 : index
    %c0_65 = arith.constant 0 : index
    %157 = vector.load %arg6[%c0_64, %c0_65] : memref<96x128xf32, #tpu.memory_space<vmem>>, vector<32x128xf32>
    %cst_66 = arith.constant dense<0.000000e+00> : vector<8x128xf32>
    %158 = tpu.matmul %99, %157, %cst_66 {dimension_numbers = #tpu.dot_dimension_numbers<[1], [0], [0], [1], [0, 0, 1, 1], [], []>} : vector<8x32xf32>, vector<32x128xf32>, vector<8x128xf32> -> vector<8x128xf32>
    %c32 = arith.constant 32 : index
    %c0_67 = arith.constant 0 : index
    %159 = vector.load %arg6[%c32, %c0_67] : memref<96x128xf32, #tpu.memory_space<vmem>>, vector<64x128xf32>
    %cst_68 = arith.constant dense<0.000000e+00> : vector<8x128xf32>
    %160 = tpu.matmul %156, %159, %cst_68 {dimension_numbers = #tpu.dot_dimension_numbers<[1], [0], [0], [1], [0, 0, 1, 1], [], []>} : vector<8x64xf32>, vector<64x128xf32>, vector<8x128xf32> -> vector<8x128xf32>
    %161 = arith.addf %158, %160 : vector<8x128xf32>
    %c15 = arith.constant 15 : index
    %c0_69 = arith.constant 0 : index
    %162 = vector.load %arg7[%c15, %c0_69] : memref<16x128xf32, #tpu.memory_space<vmem>>, vector<1x128xf32>
    %163 = vector.broadcast %162 : vector<1x128xf32> to vector<8x128xf32>
    %164 = arith.addf %161, %163 : vector<8x128xf32>
    %c0_70 = arith.constant 0 : index
    %c0_71 = arith.constant 0 : index
    %165 = vector.load %arg8[%c0_70, %c0_71] : memref<8x128xf32, #tpu.memory_space<vmem>>, vector<8x128xf32>
    tpu.vector_store %arg8[%c0_70, %c0_71], %164 {strides = array<i32>} : memref<8x128xf32, #tpu.memory_space<vmem>>, vector<8x128xf32>,
    return
  }
}

</mosaic_0001>

<llo_original>
// kernel: aefuzzy_forward_slab.1
$region0: #{aefuzzy_forward_slab.1}
  #allocation0 [shape = 'u32[]', space=smem, size = 0x4, offset = 0x4, fixed_abs, tag = 'smem constant byte address 0x4 - core index']
  #allocation1 [shape = 'u32[72,128]{1,0:T(1,128)}', space=vmem, size = 0x9000, scoped, tag = 'internal scratch']
  %s0 = inlined_call_operand.vmem [shape: f32[5], index: 0, kind: input, shape index: {}]
  %s1 = inlined_call_operand.vmem [shape: f32[8,35], index: 1, kind: input, shape index: {}]
  %s2 = inlined_call_operand.vmem [shape: f32[35,32], index: 2, kind: input, shape index: {}]
  %s3 = inlined_call_operand.vmem [shape: f32[32,16], index: 3, kind: input, shape index: {}]
  %s4 = inlined_call_operand.vmem [shape: f32[16,256], index: 4, kind: input, shape index: {}]
  %s5 = inlined_call_operand.vmem [shape: f32[128,64], index: 5, kind: input, shape index: {}]
  %s6 = inlined_call_operand.vmem [shape: f32[96,128], index: 6, kind: input, shape index: {}]
  %s7 = inlined_call_operand.vmem [shape: f32[16,128], index: 7, kind: input, shape index: {}]
  %s8 = inlined_call_operand.hbm [shape: f32[8,128], index: 8, kind: output, shape index: {}]
  %s9 = sld [smem:[#allocation0]]
  $region46: #{aefuzzy_forward_slab.1} parent=0
    _
  %s11 = ssub.s32 1, %s9
  %s12 = scalar_select 0, %s11, %s9
  $region1: #{aefuzzy_forward_slab.1} parent=0
    #allocation2 [shape = 'u8[512]{0}', space=smem, size = 0x200, scoped, tag = 'input window, operand 0, single buffered']
    #allocation3 [shape = 's32[1]{0}', space=sflag, size = 0x4, scoped, tag = 'scoped memory for aefuzzy_forward_slab.1']
    #allocation4 [shape = 's32[1]{0}', space=sflag, size = 0x4, scoped, tag = 'scoped memory for aefuzzy_forward_slab.1']
    #allocation5 [shape = 'u8[4096]{0}', space=vmem, size = 0x1000, scoped, tag = 'output window, operand 0, single buffered']
    %13 = vsyncpa [#allocation4], 0
    %14 = vsyncpa [#allocation3], 0
    // Predicated region
    $region2: #{aefuzzy_forward_slab.1} parent=1 // pred_check
      _
    $region3: #{aefuzzy_forward_slab.1} parent=1 // pred_check_branch
      %16 = sbr.rel (0) target = $region5
    $region4: #{aefuzzy_forward_slab.1} parent=1 // pred_region
      %18 = vsyncadd [#allocation4], 0
      %s20 = sshll.u32 %s0, 4
      %s21 = int_to_ptr.vmem [resolvable:$true] %s20
      %23 = dma.vmem_to_smem %s21, 16, [#allocation2], [#allocation4]
    $region5: #{aefuzzy_forward_slab.1} parent=1 // pred_fallthru
      _
    // Predicated region
    $region6: #{aefuzzy_forward_slab.1} parent=1 // pred_check
      _
    $region7: #{aefuzzy_forward_slab.1} parent=1 // pred_check_branch
      %25 = sbr.rel (0) target = $region9
    $region8: #{aefuzzy_forward_slab.1} parent=1 // pred_region
      _
    $region9: #{aefuzzy_forward_slab.1} parent=1 // pred_fallthru
      _
    // Predicated region
    $region10: #{aefuzzy_forward_slab.1} parent=1 // pred_check
      _
    $region11: #{aefuzzy_forward_slab.1} parent=1 // pred_check_branch
      %27 = sbr.rel (0) target = $region13
    $region12: #{aefuzzy_forward_slab.1} parent=1 // pred_region
      _
    $region13: #{aefuzzy_forward_slab.1} parent=1 // pred_fallthru
      _
    // Predicated region
    $region14: #{aefuzzy_forward_slab.1} parent=1 // pred_check
      _
    $region15: #{aefuzzy_forward_slab.1} parent=1 // pred_check_branch
      %29 = sbr.rel (0) target = $region17
    $region16: #{aefuzzy_forward_slab.1} parent=1 // pred_region
      _
    $region17: #{aefuzzy_forward_slab.1} parent=1 // pred_fallthru
      _
    // Predicated region
    $region18: #{aefuzzy_forward_slab.1} parent=1 // pred_check
      _
    $region19: #{aefuzzy_forward_slab.1} parent=1 // pred_check_branch
      %31 = sbr.rel (0) target = $region21
    $region20: #{aefuzzy_forward_slab.1} parent=1 // pred_region
      _
    $region21: #{aefuzzy_forward_slab.1} parent=1 // pred_fallthru
      _
    // Predicated region
    $region22: #{aefuzzy_forward_slab.1} parent=1 // pred_check
      _
    $region23: #{aefuzzy_forward_slab.1} parent=1 // pred_check_branch
      %33 = sbr.rel (0) target = $region25
    $region24: #{aefuzzy_forward_slab.1} parent=1 // pred_region
      _
    $region25: #{aefuzzy_forward_slab.1} parent=1 // pred_fallthru
      _
    // Predicated region
    $region26: #{aefuzzy_forward_slab.1} parent=1 // pred_check
      _
    $region27: #{aefuzzy_forward_slab.1} parent=1 // pred_check_branch
      %35 = sbr.rel (0) target = $region29
    $region28: #{aefuzzy_forward_slab.1} parent=1 // pred_region
      _
    $region29: #{aefuzzy_forward_slab.1} parent=1 // pred_fallthru
      _
    // Predicated region
    $region30: #{aefuzzy_forward_slab.1} parent=1 // pred_check
      _
    $region31: #{aefuzzy_forward_slab.1} parent=1 // pred_check_branch
      %37 = sbr.rel (0) target = $region33
    $region32: #{aefuzzy_forward_slab.1} parent=1 // pred_region
      _
    $region33: #{aefuzzy_forward_slab.1} parent=1 // pred_fallthru
      _
    // Predicated region
    $region34: #{aefuzzy_forward_slab.1} parent=1 // pred_check
      _
    $region35: #{aefuzzy_forward_slab.1} parent=1 // pred_check_branch
      %39 = sbr.rel (0) target = $region37
    $region36: #{aefuzzy_forward_slab.1} parent=1 // pred_region
      %41 = dma.done [#allocation4], 16
    $region37: #{aefuzzy_forward_slab.1} parent=1 // pred_fallthru
      _
    %42 = sfence
    %v43 = vld [vmem:[%s1] sm:$0xff]
    %v44 = vld [vmem:[%s2] sm:$0xff]
    %v45 = vld [vmem:[%s2 + $0x8] sm:$0xff]
    %v46 = vld [vmem:[%s2 + $0x10] sm:$0xff]
    %v47 = vld [vmem:[%s2 + $0x18] sm:$0xff]
    %v48 = vld [vmem:[%s2 + $0x20] sm:$0x7]
    %v49 = vld [vmem:[%s7] sm:$0x1]
    %v50 = vperm.slane %v49, 0
    %vm51 = vcmask 285696
    %v53 = vsel %vm51, %v43, 0
    %vm55 = vcmask 1042432
    %v57 = vsel %vm55, %v48, 0
    %59 = vmatpush.msra.mxu0 0.0
    %60 = vmatpush.msra.mxu0 0.0
    %61 = vmatpush.msra.mxu0 0.0
    %62 = vmatpush.msra.mxu0 0.0
    %63 = vmatpush.msra.mxu0 0.0
    %64 = vmatpush.msra.mxu0 0.0
    %65 = vmatpush.msra.mxu0 0.0
    %66 = vmatpush.msra.mxu0 0.0
    %67 = vmatpush.msra.mxu0 0.0
    %68 = vmatpush.msra.mxu0 0.0
    %69 = vmatpush.msra.mxu0 0.0
    %70 = vmatpush.msra.mxu0 %v57
    %71 = vmatpush.msra.mxu0 %v47
    %72 = vmatpush.msra.mxu0 %v46
    %73 = vmatpush.msra.mxu0 %v45
    %74 = vmatpush.msra.mxu0 %v44
    %75 = vmatmul.f32.gmra.mxu0 %v53
    %v76 = vpop.f32.mrf.mxu0
    %v77 = vadd.f32 %v50, %v76
    %78 = vdwg.mxu0
    %v79 = vld [vmem:[%s7 + $0x1] sm:$0x1]
    %v80 = vld [vmem:[%s7 + $0x2] sm:$0x1]
    %vm81 = vcmask 64512
    %v83 = vsel %vm81, 1.0, 0
    %85 = vmatpush.msra.mxu0 0.0
    %86 = vmatpush.msra.mxu0 0.0
    %87 = vmatpush.msra.mxu0 0.0
    %88 = vmatpush.msra.mxu0 0.0
    %89 = vmatpush.msra.mxu0 0.0
    %90 = vmatpush.msra.mxu0 0.0
    %91 = vmatpush.msra.mxu0 0.0
    %92 = vmatpush.msra.mxu0 0.0
    %93 = vmatpush.msra.mxu0 0.0
    %94 = vmatpush.msra.mxu0 0.0
    %95 = vmatpush.msra.mxu0 0.0
    %96 = vmatpush.msra.mxu0 0.0
    %97 = vmatpush.msra.mxu0 0.0
    %98 = vmatpush.msra.mxu0 0.0
    %99 = vmatpush.msra.mxu0 0.0
    %100 = vmatpush.msra.mxu0 %v77
    %101 = vmatmul.f32.gmra.mxu0 %v83
    %v102 = vpop.f32.mrf.mxu0
    %v103 = vadd.f32 0.0, %v102
    %104 = vdwg.mxu0
    %v105 = vmul.f32 %v103, 0.125
    %v106 = vperm.slane %v105, 0
    %v107 = vsub.f32 %v77, %v106
    %v108 = vmul.f32 %v107, %v107
    %109 = vmatpush.msra.mxu0 0.0
    %110 = vmatpush.msra.mxu0 0.0
    %111 = vmatpush.msra.mxu0 0.0
    %112 = vmatpush.msra.mxu0 0.0
    %113 = vmatpush.msra.mxu0 0.0
    %114 = vmatpush.msra.mxu0 0.0
    %115 = vmatpush.msra.mxu0 0.0
    %116 = vmatpush.msra.mxu0 0.0
    %117 = vmatpush.msra.mxu0 0.0
    %118 = vmatpush.msra.mxu0 0.0
    %119 = vmatpush.msra.mxu0 0.0
    %120 = vmatpush.msra.mxu0 0.0
    %121 = vmatpush.msra.mxu0 0.0
    %122 = vmatpush.msra.mxu0 0.0
    %123 = vmatpush.msra.mxu0 0.0
    %124 = vmatpush.msra.mxu0 %v108
    %125 = vmatmul.f32.gmra.mxu0 %v83
    %v126 = vpop.f32.mrf.mxu0
    %v127 = vadd.f32 0.0, %v126
    %128 = vdwg.mxu0
    %v129 = vmul.f32 %v127, 0.125
    %v130 = vadd.f32 %v129, 1e-05
    %v131 = vrsqrt.pop %v130
    %v132 = vmul.f32 %v131, %v130
    %v133 = vmul.f32 %v132, %v131
    %v134 = vmul.f32 0.5, %v133
    %v135 = vsub.f32 1.5, %v134
    %v136 = vmul.f32 %v131, %v135
    %vm137 = vweird.f32 %v130
    %vm138 = vweird.f32 %v131
    %vm139 = vmor %vm137, %vm138
    %v140 = vsel %vm139, %v131, %v136
    %v141 = vperm.slane %v140, 0
    %v142 = vmul.f32 %v107, %v141
    %v143 = vperm.slane %v79, 0
    %v144 = vmul.f32 %v142, %v143
    %v145 = vperm.slane %v80, 0
    %v146 = vadd.f32 %v144, %v145
    %s147 = sld [smem:[#allocation2]]
    %vm148 = vcmp.gt.f32.partialorder %v146, 0.0
    %v149 = vstv %s147
    %v150 = vmul.f32 %v149, %v146
    %v151 = vsel %vm148, %v146, %v150
    %v152 = vld [vmem:[%s3] sm:$0xff]
    %v153 = vld [vmem:[%s3 + $0x8] sm:$0xff]
    %v154 = vld [vmem:[%s3 + $0x10] sm:$0xff]
    %v155 = vld [vmem:[%s3 + $0x18] sm:$0xff]
    %v156 = vld [vmem:[%s7 + $0x3] sm:$0x1]
    %v157 = vperm.slane %v156, 0
    %vm158 = vcmask 261120
    %v160 = vsel %vm158, %v151, 0
    %162 = vmatpush.msra.mxu0 0.0
    %163 = vmatpush.msra.mxu0 0.0
    %164 = vmatpush.msra.mxu0 0.0
    %165 = vmatpush.msra.mxu0 0.0
    %166 = vmatpush.msra.mxu0 0.0
    %167 = vmatpush.msra.mxu0 0.0
    %168 = vmatpush.msra.mxu0 0.0
    %169 = vmatpush.msra.mxu0 0.0
    %170 = vmatpush.msra.mxu0 0.0
    %171 = vmatpush.msra.mxu0 0.0
    %172 = vmatpush.msra.mxu0 0.0
    %173 = vmatpush.msra.mxu0 0.0
    %174 = vmatpush.msra.mxu0 %v155
    %175 = vmatpush.msra.mxu0 %v154
    %176 = vmatpush.msra.mxu0 %v153
    %177 = vmatpush.msra.mxu0 %v152
    %178 = vmatmul.f32.gmra.mxu0 %v160
    %v179 = vpop.f32.mrf.mxu0
    %v180 = vadd.f32 %v157, %v179
    %181 = vdwg.mxu0
    %v182 = vld [vmem:[%s7 + $0x4] sm:$0x1]
    %v183 = vld [vmem:[%s7 + $0x5] sm:$0x1]
    %184 = vmatpush.msra.mxu0 0.0
    %185 = vmatpush.msra.mxu0 0.0
    %186 = vmatpush.msra.mxu0 0.0
    %187 = vmatpush.msra.mxu0 0.0
    %188 = vmatpush.msra.mxu0 0.0
    %189 = vmatpush.msra.mxu0 0.0
    %190 = vmatpush.msra.mxu0 0.0
    %191 = vmatpush.msra.mxu0 0.0
    %192 = vmatpush.msra.mxu0 0.0
    %193 = vmatpush.msra.mxu0 0.0
    %194 = vmatpush.msra.mxu0 0.0
    %195 = vmatpush.msra.mxu0 0.0
    %196 = vmatpush.msra.mxu0 0.0
    %197 = vmatpush.msra.mxu0 0.0
    %198 = vmatpush.msra.mxu0 0.0
    %199 = vmatpush.msra.mxu0 %v180
    %200 = vmatmul.f32.gmra.mxu0 %v83
    %v201 = vpop.f32.mrf.mxu0
    %v202 = vadd.f32 0.0, %v201
    %203 = vdwg.mxu0
    %v204 = vmul.f32 %v202, 0.125
    %v205 = vperm.slane %v204, 0
    %v206 = vsub.f32 %v180, %v205
    %v207 = vmul.f32 %v206, %v206
    %208 = vmatpush.msra.mxu0 0.0
    %209 = vmatpush.msra.mxu0 0.0
    %210 = vmatpush.msra.mxu0 0.0
    %211 = vmatpush.msra.mxu0 0.0
    %212 = vmatpush.msra.mxu0 0.0
    %213 = vmatpush.msra.mxu0 0.0
    %214 = vmatpush.msra.mxu0 0.0
    %215 = vmatpush.msra.mxu0 0.0
    %216 = vmatpush.msra.mxu0 0.0
    %217 = vmatpush.msra.mxu0 0.0
    %218 = vmatpush.msra.mxu0 0.0
    %219 = vmatpush.msra.mxu0 0.0
    %220 = vmatpush.msra.mxu0 0.0
    %221 = vmatpush.msra.mxu0 0.0
    %222 = vmatpush.msra.mxu0 0.0
    %223 = vmatpush.msra.mxu0 %v207
    %224 = vmatmul.f32.gmra.mxu0 %v83
    %v225 = vpop.f32.mrf.mxu0
    %v226 = vadd.f32 0.0, %v225
    %227 = vdwg.mxu0
    %v228 = vmul.f32 %v226, 0.125
    %v229 = vadd.f32 %v228, 1e-05
    %v230 = vrsqrt.pop %v229
    %v231 = vmul.f32 %v230, %v229
    %v232 = vmul.f32 %v231, %v230
    %v233 = vmul.f32 0.5, %v232
    %v234 = vsub.f32 1.5, %v233
    %v235 = vmul.f32 %v230, %v234
    %vm236 = vweird.f32 %v229
    %vm237 = vweird.f32 %v230
    %vm238 = vmor %vm236, %vm237
    %v239 = vsel %vm238, %v230, %v235
    %v240 = vperm.slane %v239, 0
    %v241 = vmul.f32 %v206, %v240
    %v242 = vperm.slane %v182, 0
    %v243 = vmul.f32 %v241, %v242
    %v244 = vperm.slane %v183, 0
    %v245 = vadd.f32 %v243, %v244
    %s246 = sld [smem:[#allocation2 + $0x1]]
    %vm247 = vcmp.gt.f32.partialorder %v245, 0.0
    %v248 = vstv %s246
    %v249 = vmul.f32 %v248, %v245
    %v250 = vsel %vm247, %v245, %v249
    %v251 = vld [vmem:[%s4] sm:$0xff]
    %v252 = vld [vmem:[%s4 + $0x8] sm:$0xff]
    %v253 = vld [vmem:[%s4 + $0x10] sm:$0xff]
    %v254 = vld [vmem:[%s4 + $0x18] sm:$0xff]
    %vm255 = vcmask 130048
    %v257 = vsel %vm255, %v250, 0
    %259 = vmatpush.msra.mxu0 0.0
    %260 = vmatpush.msra.mxu0 0.0
    %261 = vmatpush.msra.mxu0 0.0
    %262 = vmatpush.msra.mxu0 0.0
    %263 = vmatpush.msra.mxu0 0.0
    %264 = vmatpush.msra.mxu0 0.0
    %265 = vmatpush.msra.mxu0 0.0
    %266 = vmatpush.msra.mxu0 0.0
    %267 = vmatpush.msra.mxu0 0.0
    %268 = vmatpush.msra.mxu0 0.0
    %269 = vmatpush.msra.mxu0 0.0
    %270 = vmatpush.msra.mxu0 0.0
    %271 = vmatpush.msra.mxu0 0.0
    %272 = vmatpush.msra.mxu0 0.0
    %273 = vmatpush.msra.mxu0 %v253
    %274 = vmatpush.msra.mxu0 %v251
    %275 = vmatmul.f32.gmra.mxu0 %v257
    %v276 = vpop.f32.mrf.mxu0
    %v277 = vadd.f32 0.0, %v276
    %278 = vdwg.mxu0
    %279 = vmatpush.msra.mxu0 0.0
    %280 = vmatpush.msra.mxu0 0.0
    %281 = vmatpush.msra.mxu0 0.0
    %282 = vmatpush.msra.mxu0 0.0
    %283 = vmatpush.msra.mxu0 0.0
    %284 = vmatpush.msra.mxu0 0.0
    %285 = vmatpush.msra.mxu0 0.0
    %286 = vmatpush.msra.mxu0 0.0
    %287 = vmatpush.msra.mxu0 0.0
    %288 = vmatpush.msra.mxu0 0.0
    %289 = vmatpush.msra.mxu0 0.0
    %290 = vmatpush.msra.mxu0 0.0
    %291 = vmatpush.msra.mxu0 0.0
    %292 = vmatpush.msra.mxu0 0.0
    %293 = vmatpush.msra.mxu0 %v254
    %294 = vmatpush.msra.mxu0 %v252
    %295 = vmatmul.f32.gmra.mxu0 %v257
    %v296 = vpop.f32.mrf.mxu0
    %v297 = vadd.f32 0.0, %v296
    %298 = vdwg.mxu0
    %v299 = vld [vmem:[%s7 + $0x9] sm:$0x1]
    %v300 = vperm.slane %v299, 0
    %v301 = vadd.f32 %v277, %v300
    %v302 = vld [vmem:[%s7 + $0x6] sm:$0x1]
    %v303 = vperm.slane %v302, 0
    %v304 = vadd.f32 %v297, %v303
    %v305 = vld [vmem:[%s7 + $0x7] sm:$0x1]
    %v306 = vld [vmem:[%s7 + $0x8] sm:$0x1]
    %307 = vmatpush.msra.mxu0 0.0
    %308 = vmatpush.msra.mxu0 0.0
    %309 = vmatpush.msra.mxu0 0.0
    %310 = vmatpush.msra.mxu0 0.0
    %311 = vmatpush.msra.mxu0 0.0
    %312 = vmatpush.msra.mxu0 0.0
    %313 = vmatpush.msra.mxu0 0.0
    %314 = vmatpush.msra.mxu0 0.0
    %315 = vmatpush.msra.mxu0 0.0
    %316 = vmatpush.msra.mxu0 0.0
    %317 = vmatpush.msra.mxu0 0.0
    %318 = vmatpush.msra.mxu0 0.0
    %319 = vmatpush.msra.mxu0 0.0
    %320 = vmatpush.msra.mxu0 0.0
    %321 = vmatpush.msra.mxu0 0.0
    %322 = vmatpush.msra.mxu0 %v304
    %323 = vmatmul.f32.gmra.mxu0 %v83
    %v324 = vpop.f32.mrf.mxu0
    %v325 = vadd.f32 0.0, %v324
    %326 = vdwg.mxu0
    %v327 = vmul.f32 %v325, 0.125
    %v328 = vperm.slane %v327, 0
    %v329 = vsub.f32 %v304, %v328
    %v330 = vmul.f32 %v329, %v329
    %331 = vmatpush.msra.mxu0 0.0
    %332 = vmatpush.msra.mxu0 0.0
    %333 = vmatpush.msra.mxu0 0.0
    %334 = vmatpush.msra.mxu0 0.0
    %335 = vmatpush.msra.mxu0 0.0
    %336 = vmatpush.msra.mxu0 0.0
    %337 = vmatpush.msra.mxu0 0.0
    %338 = vmatpush.msra.mxu0 0.0
    %339 = vmatpush.msra.mxu0 0.0
    %340 = vmatpush.msra.mxu0 0.0
    %341 = vmatpush.msra.mxu0 0.0
    %342 = vmatpush.msra.mxu0 0.0
    %343 = vmatpush.msra.mxu0 0.0
    %344 = vmatpush.msra.mxu0 0.0
    %345 = vmatpush.msra.mxu0 0.0
    %346 = vmatpush.msra.mxu0 %v330
    %347 = vmatmul.f32.gmra.mxu0 %v83
    %v348 = vpop.f32.mrf.mxu0
    %v349 = vadd.f32 0.0, %v348
    %350 = vdwg.mxu0
    %v351 = vmul.f32 %v349, 0.125
    %v352 = vadd.f32 %v351, 1e-05
    %v353 = vrsqrt.pop %v352
    %v354 = vmul.f32 %v353, %v352
    %v355 = vmul.f32 %v354, %v353
    %v356 = vmul.f32 0.5, %v355
    %v357 = vsub.f32 1.5, %v356
    %v358 = vmul.f32 %v353, %v357
    %vm359 = vweird.f32 %v352
    %vm360 = vweird.f32 %v353
    %vm361 = vmor %vm359, %vm360
    %v362 = vsel %vm361, %v353, %v358
    %v363 = vperm.slane %v362, 0
    %v364 = vmul.f32 %v329, %v363
    %v365 = vperm.slane %v305, 0
    %v366 = vmul.f32 %v364, %v365
    %v367 = vperm.slane %v306, 0
    %v368 = vadd.f32 %v366, %v367
    %s369 = sld [smem:[#allocation2 + $0x2]]
    %vm370 = vcmp.gt.f32.partialorder %v368, 0.0
    %v371 = vstv %s369
    %v372 = vmul.f32 %v371, %v368
    %v373 = vsel %vm370, %v368, %v372
    %v374 = vld [vmem:[%s7 + $0xa] sm:$0x1]
    %v375 = vld [vmem:[%s7 + $0xb] sm:$0x1]
    %376 = vmatpush.msra.mxu0 0.0
    %377 = vmatpush.msra.mxu0 0.0
    %378 = vmatpush.msra.mxu0 0.0
    %379 = vmatpush.msra.mxu0 0.0
    %380 = vmatpush.msra.mxu0 0.0
    %381 = vmatpush.msra.mxu0 0.0
    %382 = vmatpush.msra.mxu0 0.0
    %383 = vmatpush.msra.mxu0 0.0
    %384 = vmatpush.msra.mxu0 0.0
    %385 = vmatpush.msra.mxu0 0.0
    %386 = vmatpush.msra.mxu0 0.0
    %387 = vmatpush.msra.mxu0 0.0
    %388 = vmatpush.msra.mxu0 0.0
    %389 = vmatpush.msra.mxu0 0.0
    %390 = vmatpush.msra.mxu0 0.0
    %391 = vmatpush.msra.mxu0 %v301
    %392 = vmatmul.f32.gmra.mxu0 %v83
    %v393 = vpop.f32.mrf.mxu0
    %v394 = vadd.f32 0.0, %v393
    %395 = vdwg.mxu0
    %v396 = vmul.f32 %v394, 0.125
    %v397 = vperm.slane %v396, 0
    %v398 = vsub.f32 %v301, %v397
    %v399 = vmul.f32 %v398, %v398
    %400 = vmatpush.msra.mxu0 0.0
    %401 = vmatpush.msra.mxu0 0.0
    %402 = vmatpush.msra.mxu0 0.0
    %403 = vmatpush.msra.mxu0 0.0
    %404 = vmatpush.msra.mxu0 0.0
    %405 = vmatpush.msra.mxu0 0.0
    %406 = vmatpush.msra.mxu0 0.0
    %407 = vmatpush.msra.mxu0 0.0
    %408 = vmatpush.msra.mxu0 0.0
    %409 = vmatpush.msra.mxu0 0.0
    %410 = vmatpush.msra.mxu0 0.0
    %411 = vmatpush.msra.mxu0 0.0
    %412 = vmatpush.msra.mxu0 0.0
    %413 = vmatpush.msra.mxu0 0.0
    %414 = vmatpush.msra.mxu0 0.0
    %415 = vmatpush.msra.mxu0 %v399
    %416 = vmatmul.f32.gmra.mxu0 %v83
    %v417 = vpop.f32.mrf.mxu0
    %v418 = vadd.f32 0.0, %v417
    %419 = vdwg.mxu0
    %v420 = vmul.f32 %v418, 0.125
    %v421 = vadd.f32 %v420, 1e-05
    %v422 = vrsqrt.pop %v421
    %v423 = vmul.f32 %v422, %v421
    %v424 = vmul.f32 %v423, %v422
    %v425 = vmul.f32 0.5, %v424
    %v426 = vsub.f32 1.5, %v425
    %v427 = vmul.f32 %v422, %v426
    %vm428 = vweird.f32 %v421
    %vm429 = vweird.f32 %v422
    %vm430 = vmor %vm428, %vm429
    %v431 = vsel %vm430, %v422, %v427
    %v432 = vperm.slane %v431, 0
    %v433 = vmul.f32 %v398, %v432
    %v434 = vperm.slane %v374, 0
    %v435 = vmul.f32 %v433, %v434
    %v436 = vperm.slane %v375, 0
    %v437 = vadd.f32 %v435, %v436
    %s438 = sld [smem:[#allocation2 + $0x3]]
    %vm439 = vcmp.gt.f32.partialorder %v437, 0.0
    %v440 = vstv %s438
    %v441 = vmul.f32 %v440, %v437
    %v442 = vsel %vm439, %v437, %v441
    %v443 = vld [vmem:[%s5] sm:$0xff]
    %v444 = vld [vmem:[%s5 + $0x8] sm:$0xff]
    %v445 = vld [vmem:[%s5 + $0x10] sm:$0xff]
    %v446 = vld [vmem:[%s5 + $0x18] sm:$0xff]
    %v447 = vld [vmem:[%s5 + $0x20] sm:$0xff]
    %v448 = vld [vmem:[%s5 + $0x28] sm:$0xff]
    %v449 = vld [vmem:[%s5 + $0x30] sm:$0xff]
    %v450 = vld [vmem:[%s5 + $0x38] sm:$0xff]
    %v451 = vld [vmem:[%s5 + $0x40] sm:$0xff]
    %v452 = vld [vmem:[%s5 + $0x48] sm:$0xff]
    %v453 = vld [vmem:[%s5 + $0x50] sm:$0xff]
    %v454 = vld [vmem:[%s5 + $0x58] sm:$0xff]
    %v455 = vld [vmem:[%s5 + $0x60] sm:$0xff]
    %v456 = vld [vmem:[%s5 + $0x68] sm:$0xff]
    %v457 = vld [vmem:[%s5 + $0x70] sm:$0xff]
    %v458 = vld [vmem:[%s5 + $0x78] sm:$0xff]
    %v459 = vld [vmem:[%s7 + $0xc] sm:$0x1]
    %v460 = vperm.slane %v459, 0
    %461 = vmatpush.msra.mxu0 %v458
    %462 = vmatpush.msra.mxu0 %v457
    %463 = vmatpush.msra.mxu0 %v456
    %464 = vmatpush.msra.mxu0 %v455
    %465 = vmatpush.msra.mxu0 %v454
    %466 = vmatpush.msra.mxu0 %v453
    %467 = vmatpush.msra.mxu0 %v452
    %468 = vmatpush.msra.mxu0 %v451
    %469 = vmatpush.msra.mxu0 %v450
    %470 = vmatpush.msra.mxu0 %v449
    %471 = vmatpush.msra.mxu0 %v448
    %472 = vmatpush.msra.mxu0 %v447
    %473 = vmatpush.msra.mxu0 %v446
    %474 = vmatpush.msra.mxu0 %v445
    %475 = vmatpush.msra.mxu0 %v444
    %476 = vmatpush.msra.mxu0 %v443
    %477 = vmatmul.f32.gmra.mxu0 %v442
    %v478 = vpop.f32.mrf.mxu0
    %v479 = vadd.f32 %v460, %v478
    %480 = vdwg.mxu0
    %v481 = vld [vmem:[%s7 + $0xd] sm:$0x1]
    %v482 = vld [vmem:[%s7 + $0xe] sm:$0x1]
    %483 = vmatpush.msra.mxu0 0.0
    %484 = vmatpush.msra.mxu0 0.0
    %485 = vmatpush.msra.mxu0 0.0
    %486 = vmatpush.msra.mxu0 0.0
    %487 = vmatpush.msra.mxu0 0.0
    %488 = vmatpush.msra.mxu0 0.0
    %489 = vmatpush.msra.mxu0 0.0
    %490 = vmatpush.msra.mxu0 0.0
    %491 = vmatpush.msra.mxu0 0.0
    %492 = vmatpush.msra.mxu0 0.0
    %493 = vmatpush.msra.mxu0 0.0
    %494 = vmatpush.msra.mxu0 0.0
    %495 = vmatpush.msra.mxu0 0.0
    %496 = vmatpush.msra.mxu0 0.0
    %497 = vmatpush.msra.mxu0 0.0
    %498 = vmatpush.msra.mxu0 %v479
    %499 = vmatmul.f32.gmra.mxu0 %v83
    %v500 = vpop.f32.mrf.mxu0
    %v501 = vadd.f32 0.0, %v500
    %502 = vdwg.mxu0
    %v503 = vmul.f32 %v501, 0.125
    %v504 = vperm.slane %v503, 0
    %v505 = vsub.f32 %v479, %v504
    %v506 = vmul.f32 %v505, %v505
    %507 = vmatpush.msra.mxu0 0.0
    %508 = vmatpush.msra.mxu0 0.0
    %509 = vmatpush.msra.mxu0 0.0
    %510 = vmatpush.msra.mxu0 0.0
    %511 = vmatpush.msra.mxu0 0.0
    %512 = vmatpush.msra.mxu0 0.0
    %513 = vmatpush.msra.mxu0 0.0
    %514 = vmatpush.msra.mxu0 0.0
    %515 = vmatpush.msra.mxu0 0.0
    %516 = vmatpush.msra.mxu0 0.0
    %517 = vmatpush.msra.mxu0 0.0
    %518 = vmatpush.msra.mxu0 0.0
    %519 = vmatpush.msra.mxu0 0.0
    %520 = vmatpush.msra.mxu0 0.0
    %521 = vmatpush.msra.mxu0 0.0
    %522 = vmatpush.msra.mxu0 %v506
    %523 = vmatmul.f32.gmra.mxu0 %v83
    %v524 = vpop.f32.mrf.mxu0
    %v525 = vadd.f32 0.0, %v524
    %526 = vdwg.mxu0
    %v527 = vmul.f32 %v525, 0.125
    %v528 = vadd.f32 %v527, 1e-05
    %v529 = vrsqrt.pop %v528
    %v530 = vmul.f32 %v529, %v528
    %v531 = vmul.f32 %v530, %v529
    %v532 = vmul.f32 0.5, %v531
    %v533 = vsub.f32 1.5, %v532
    %v534 = vmul.f32 %v529, %v533
    %vm535 = vweird.f32 %v528
    %vm536 = vweird.f32 %v529
    %vm537 = vmor %vm535, %vm536
    %v538 = vsel %vm537, %v529, %v534
    %v539 = vperm.slane %v538, 0
    %v540 = vmul.f32 %v505, %v539
    %v541 = vperm.slane %v481, 0
    %v542 = vmul.f32 %v540, %v541
    %v543 = vperm.slane %v482, 0
    %v544 = vadd.f32 %v542, %v543
    %s545 = sld [smem:[#allocation2 + $0x4]]
    %vm546 = vcmp.gt.f32.partialorder %v544, 0.0
    %v547 = vstv %s545
    %v548 = vmul.f32 %v547, %v544
    %v549 = vsel %vm546, %v544, %v548
    %v550 = vld [vmem:[%s6] sm:$0xff]
    %v551 = vld [vmem:[%s6 + $0x8] sm:$0xff]
    %v552 = vld [vmem:[%s6 + $0x10] sm:$0xff]
    %v553 = vld [vmem:[%s6 + $0x18] sm:$0xff]
    %v554 = vld [vmem:[%s6 + $0x20] sm:$0xff]
    %v555 = vld [vmem:[%s6 + $0x28] sm:$0xff]
    %v556 = vld [vmem:[%s6 + $0x30] sm:$0xff]
    %v557 = vld [vmem:[%s6 + $0x38] sm:$0xff]
    %v558 = vld [vmem:[%s6 + $0x40] sm:$0xff]
    %v559 = vld [vmem:[%s6 + $0x48] sm:$0xff]
    %v560 = vld [vmem:[%s6 + $0x50] sm:$0xff]
    %v561 = vld [vmem:[%s6 + $0x58] sm:$0xff]
    %vm562 = vcmask 523264
    %v564 = vsel %vm562, %v549, 0
    %566 = vmatpush.msra.mxu0 0.0
    %567 = vmatpush.msra.mxu0 0.0
    %568 = vmatpush.msra.mxu0 0.0
    %569 = vmatpush.msra.mxu0 0.0
    %570 = vmatpush.msra.mxu0 0.0
    %571 = vmatpush.msra.mxu0 0.0
    %572 = vmatpush.msra.mxu0 0.0
    %573 = vmatpush.msra.mxu0 0.0
    %574 = vmatpush.msra.mxu0 %v561
    %575 = vmatpush.msra.mxu0 %v560
    %576 = vmatpush.msra.mxu0 %v559
    %577 = vmatpush.msra.mxu0 %v558
    %578 = vmatpush.msra.mxu0 %v557
    %579 = vmatpush.msra.mxu0 %v556
    %580 = vmatpush.msra.mxu0 %v555
    %581 = vmatpush.msra.mxu0 %v554
    %582 = vmatmul.f32.gmra.mxu0 %v564
    %v583 = vpop.f32.mrf.mxu0
    %v584 = vadd.f32 0.0, %v583
    %585 = vdwg.mxu0
    %v587 = vsel %vm158, %v373, 0
    %589 = vmatpush.msra.mxu0 0.0
    %590 = vmatpush.msra.mxu0 0.0
    %591 = vmatpush.msra.mxu0 0.0
    %592 = vmatpush.msra.mxu0 0.0
    %593 = vmatpush.msra.mxu0 0.0
    %594 = vmatpush.msra.mxu0 0.0
    %595 = vmatpush.msra.mxu0 0.0
    %596 = vmatpush.msra.mxu0 0.0
    %597 = vmatpush.msra.mxu0 0.0
    %598 = vmatpush.msra.mxu0 0.0
    %599 = vmatpush.msra.mxu0 0.0
    %600 = vmatpush.msra.mxu0 0.0
    %601 = vmatpush.msra.mxu0 %v553
    %602 = vmatpush.msra.mxu0 %v552
    %603 = vmatpush.msra.mxu0 %v551
    %604 = vmatpush.msra.mxu0 %v550
    %605 = vmatmul.f32.gmra.mxu0 %v587
    %v606 = vpop.f32.mrf.mxu0
    %v607 = vadd.f32 %v584, %v606
    %608 = vdwg.mxu0
    %v609 = vld [vmem:[%s7 + $0xf] sm:$0x1]
    %v610 = vperm.slane %v609, 0
    %v611 = vadd.f32 %v607, %v610
    %612 = vst [vmem:[#allocation5] sm:$0xff] %v611
    // Predicated region
    $region38: #{aefuzzy_forward_slab.1} parent=1 // pred_check
      _
    $region39: #{aefuzzy_forward_slab.1} parent=1 // pred_check_branch
      %614 = sbr.rel (0) target = $region41
    $region40: #{aefuzzy_forward_slab.1} parent=1 // pred_region
      %616 = vsyncadd [#allocation3], 0
      %s618 = sshll.u32 [#allocation5], 4
      %s619 = int_to_ptr.vmem [resolvable:$true] %s618
      %s620 = sshll.u32 %s8, 4
      %s621 = int_to_ptr.hbm [resolvable:$true] %s620
      %623 = dma.vmem_to_hbm [thread:$0]  %s619, 128, %s621, [#allocation3]
    $region41: #{aefuzzy_forward_slab.1} parent=1 // pred_fallthru
      _
    // Predicated region
    $region42: #{aefuzzy_forward_slab.1} parent=1 // pred_check
      _
    $region43: #{aefuzzy_forward_slab.1} parent=1 // pred_check_branch
      %625 = sbr.rel (0) target = $region45
    $region44: #{aefuzzy_forward_slab.1} parent=1 // pred_region
      %627 = dma.done [#allocation3], 128
    $region45: #{aefuzzy_forward_slab.1} parent=1 // pred_fallthru
      _
    %628 = vsyncpa [#allocation3], 1
    %629 = vsyncpa [#allocation4], 1

</llo_original>
